<compile_context>
chip_gen: v5e
topology: v5e:2x2
jax: 0.10.0
libtpu: 0.0.40
codegen_flags: <defaults>
</compile_context>

<pallas_src>
import functools

import jax
import jax.numpy as jnp
from jax.experimental import pallas as pl
from jax.experimental.pallas import tpu as pltpu


def _round_up(x, m):
    return ((x + m - 1) // m) * m


def _pick_tile_m(n_rows, dim, out_pad):
    """Largest row tile (multiple of 16, <=256) that keeps VMEM under budget."""
    budget = 40 << 20                               # headroom under 48 MiB cap
    resident = dim * out_pad * 2 + out_pad * 4      # W (bf16) + bias (f32)
    per_row = 2 * (dim * 2 + out_pad * 4)           # 2x buffered emb + out, per row
    avail = max(budget - resident, 1 << 20)
    tile = min(256, max(16, avail // max(per_row, 1)))
    tile = max(16, (tile // 16) * 16)               # bf16 sublane packing
    tile = min(tile, _round_up(n_rows, 16))         # never exceed (padded) rows
    return int(tile)


@functools.lru_cache(maxsize=None)
def _get_pallas_call(m_pad, dim, out_pad, tile_m, temperature):
    """Build (and cache) the pallas_call for a given padded problem size."""
    inv_temp = 1.0 / float(temperature)

    def nonterm_kernel(emb_ref, w_ref, b_ref, out_ref):
        # (tile_m, dim) bf16 @ (dim, out_pad) bf16 -> f32 on the MXU
        logits = jnp.dot(
            emb_ref[...], w_ref[...], preferred_element_type=jnp.float32
        )
        logits = (logits + b_ref[...]) * inv_temp        # bias + temperature
        # numerically-stable log_softmax over the (full-width) last axis
        m = jnp.max(logits, axis=-1, keepdims=True)
        z = logits - m
        lse = jnp.log(jnp.sum(jnp.exp(z), axis=-1, keepdims=True))
        out_ref[...] = (z - lse).astype(out_ref.dtype)

    grid = (m_pad // tile_m,)

    # VMEM budget: resident W + bias + 2x double-buffered (emb tile, out tile)
    w_bytes = dim * out_pad * 2
    b_bytes = out_pad * 4
    emb_tile_bytes = tile_m * dim * 2
    out_tile_bytes = tile_m * out_pad * 4
    vmem_need = w_bytes + b_bytes + 2 * (emb_tile_bytes + out_tile_bytes)
    vmem_limit = max(32 << 20, min(vmem_need + (2 << 20), 48 << 20))

    cost = pl.CostEstimate(
        flops=2 * m_pad * dim * out_pad,
        transcendentals=m_pad * out_pad,
        bytes_accessed=(m_pad * dim * 2 + dim * out_pad * 2
                        + out_pad * 4 + m_pad * out_pad * 4),
    )

    return pl.pallas_call(
        nonterm_kernel,
        out_shape=jax.ShapeDtypeStruct((m_pad, out_pad), jnp.float32),
        grid_spec=pl.GridSpec(
            grid=grid,
            in_specs=[
                # row tile of the embedding, streams with the grid
                pl.BlockSpec((tile_m, dim), lambda i: (i, 0)),
                # weight + bias: constant block index -> fetched once, resident
                pl.BlockSpec((dim, out_pad), lambda i: (0, 0)),
                pl.BlockSpec((1, out_pad), lambda i: (0, 0)),
            ],
            out_specs=pl.BlockSpec((tile_m, out_pad), lambda i: (i, 0)),
        ),
        compiler_params=pltpu.CompilerParams(
            dimension_semantics=("parallel",),
            vmem_limit_bytes=int(vmem_limit),
        ),
        cost_estimate=cost,
    )


def nonterm_parameterizer_forward(nonterm_emb, w, b, *, temperature=2.0,
                                  reshape=False, NT=None, NT_T=None):
    """nonterm_emb: (NT, dim) f32, w: (dim, NT_T^2) f32, b: (NT_T^2,) or
    (1, NT_T^2) f32 -> (NT, NT_T^2) f32 log-probabilities (or reshaped)."""
    NT_, dim = nonterm_emb.shape
    out_dim = w.shape[1]

    # --- padding for lane/sublane-friendly tiles ---------------------------
    out_pad = _round_up(out_dim, 128)             # lane-dense output stores
    tile_m = _pick_tile_m(NT_, dim, out_pad)      # VMEM-aware row tile
    m_pad = _round_up(NT_, tile_m)

    emb = nonterm_emb.astype(jnp.bfloat16)        # bf16 inputs, f32 accumulate
    w_bf = w.astype(jnp.bfloat16)
    b_f = jnp.asarray(b, dtype=jnp.float32).reshape(1, -1)

    if m_pad != NT_:
        emb = jnp.pad(emb, ((0, m_pad - NT_), (0, 0)))
    if out_pad != out_dim:
        w_bf = jnp.pad(w_bf, ((0, 0), (0, out_pad - out_dim)))
        # padded columns get a huge negative bias -> exp() == 0, no effect on
        # the row max / sum; they are sliced off below anyway.
        b_f = jnp.pad(b_f, ((0, 0), (0, out_pad - out_dim)),
                      constant_values=-1e30)

    call = _get_pallas_call(int(m_pad), int(dim), int(out_pad), int(tile_m),
                            float(temperature))
    out = call(emb, w_bf, b_f)

    out = out[:NT_, :out_dim]
    if reshape:
        out = out.reshape(NT, NT_T, NT_T)
    return out


if __name__ == "__main__":
    # Small config consistent with the module: dim=32, NT=8, T=8 -> NT_T=16,
    # NT_T^2 = 256.
    dim, NT, T = 32, 8, 8
    NT_T = NT + T
    temperature = 2.0

    key = jax.random.PRNGKey(0)
    k_emb, k_w, k_b = jax.random.split(key, 3)

    # Deterministic synthetic params (matching __init__ shapes):
    #   nonterm_emb ~ randn(NT, dim)
    #   rule_mlp: Linear(dim, NT_T^2) -> weight (NT_T^2, dim), bias (NT_T^2,)
    nonterm_emb = jax.random.normal(k_emb, (NT, dim), dtype=jnp.float32)
    bound = 1.0 / (dim ** 0.5)  # nn.Linear default init bound
    w_pt = jax.random.uniform(k_w, (NT_T * NT_T, dim), minval=-bound,
                              maxval=bound, dtype=jnp.float32)
    b_pt = jax.random.uniform(k_b, (NT_T * NT_T,), minval=-bound,
                              maxval=bound, dtype=jnp.float32)

    # Kernel layout: weight transposed to (dim, NT_T^2)
    w = w_pt.T
    b = b_pt

    out = nonterm_parameterizer_forward(
        nonterm_emb, w, b, temperature=temperature,
        reshape=True, NT=NT, NT_T=NT_T)
    out = jax.block_until_ready(out)

    # sanity check vs plain-JAX f32 reference (kernel uses bf16 inputs,
    # f32 accumulation -> slightly loosened tolerance)
    ref = (nonterm_emb @ w + b.reshape(1, -1)) / temperature
    ref = jax.nn.log_softmax(ref, axis=-1).reshape(NT, NT_T, NT_T)
    assert out.shape == (NT, NT_T, NT_T)
    assert jnp.allclose(out, ref, atol=2e-2, rtol=2e-2)
    # rows are valid log-distributions
    assert jnp.allclose(jnp.exp(out).reshape(NT, -1).sum(-1), 1.0, atol=1e-3)

    print("KERNEL_OK")
</pallas_src>

<mosaic_0001>
module attributes {stable_mosaic.version = 11 : i64} {
  func.func @nonterm_kernel(%arg0: i32, %arg1: memref<16x32xbf16, #tpu.memory_space<vmem>>, %arg2: memref<32x256xbf16, #tpu.memory_space<vmem>>, %arg3: memref<1x256xf32, #tpu.memory_space<vmem>>, %arg4: memref<16x256xf32, #tpu.memory_space<vmem>>) attributes {dimension_semantics = [#tpu.dimension_semantics<parallel>], iteration_bounds = array<i64: 1>, scalar_prefetch = 0 : i64, scratch_operands = 0 : i64, tpu.core_type = #tpu.core_type<tc>, window_params = [{transform_indices = @transform_0, window_bounds = array<i64: 16, 32>}, {pipeline_mode = #tpu.pipeline_mode<synchronous>, transform_indices = @transform_1, window_bounds = array<i64: 32, 256>}, {pipeline_mode = #tpu.pipeline_mode<synchronous>, transform_indices = @transform_2, window_bounds = array<i64: 1, 256>}, {transform_indices = @transform_3, window_bounds = array<i64: 16, 256>}]} {
    %c0 = arith.constant 0 : index
    %c0_0 = arith.constant 0 : index
    %0 = vector.load %arg1[%c0, %c0_0] : memref<16x32xbf16, #tpu.memory_space<vmem>>, vector<16x32xbf16>
    %c0_1 = arith.constant 0 : index
    %c0_2 = arith.constant 0 : index
    %1 = vector.load %arg2[%c0_1, %c0_2] : memref<32x256xbf16, #tpu.memory_space<vmem>>, vector<32x256xbf16>
    %cst = arith.constant dense<0.000000e+00> : vector<16x256xf32>
    %2 = tpu.matmul %0, %1, %cst {dimension_numbers = #tpu.dot_dimension_numbers<[1], [0], [0], [1], [0, 0, 1, 1], [], []>} : vector<16x32xbf16>, vector<32x256xbf16>, vector<16x256xf32> -> vector<16x256xf32>
    %c0_3 = arith.constant 0 : index
    %c0_4 = arith.constant 0 : index
    %3 = vector.load %arg3[%c0_3, %c0_4] : memref<1x256xf32, #tpu.memory_space<vmem>>, vector<1x256xf32>
    %4 = vector.broadcast %3 : vector<1x256xf32> to vector<16x256xf32>
    %5 = arith.addf %2, %4 : vector<16x256xf32>
    %cst_5 = arith.constant 5.000000e-01 : f32
    %6 = vector.broadcast %cst_5 : f32 to vector<16x256xf32>
    %7 = arith.mulf %5, %6 : vector<16x256xf32>
    %cst_6 = arith.constant dense<0xFF800000> : vector<16xf32>
    %8 = vector.multi_reduction <maximumf>, %7, %cst_6 [1] : vector<16x256xf32> to vector<16xf32>
    %9 = vector.shape_cast %8 : vector<16xf32> to vector<16x1xf32>
    %10 = vector.broadcast %9 : vector<16x1xf32> to vector<16x256xf32>
    %11 = arith.subf %7, %10 : vector<16x256xf32>
    %12 = math.exp %11 : vector<16x256xf32>
    %cst_7 = arith.constant dense<0.000000e+00> : vector<16xf32>
    %13 = vector.multi_reduction <add>, %12, %cst_7 [1] : vector<16x256xf32> to vector<16xf32>
    %14 = vector.shape_cast %13 : vector<16xf32> to vector<16x1xf32>
    %15 = math.log %14 : vector<16x1xf32>
    %16 = vector.broadcast %15 : vector<16x1xf32> to vector<16x256xf32>
    %17 = arith.subf %11, %16 : vector<16x256xf32>
    %c0_8 = arith.constant 0 : index
    %c0_9 = arith.constant 0 : index
    %18 = vector.load %arg4[%c0_8, %c0_9] : memref<16x256xf32, #tpu.memory_space<vmem>>, vector<16x256xf32>
    tpu.vector_store %arg4[%c0_8, %c0_9], %17 {strides = array<i32>} : memref<16x256xf32, #tpu.memory_space<vmem>>, vector<16x256xf32>,
    return
  }
  func.func @transform_0(%arg0: i32) -> (i32, i32) {
    %c0_i32 = arith.constant 0 : i32
    %c0_i32_0 = arith.constant 0 : i32
    return %arg0, %c0_i32 : i32, i32
  }
  func.func @transform_1(%arg0: i32) -> (i32, i32) {
    %c0_i32 = arith.constant 0 : i32
    %c0_i32_0 = arith.constant 0 : i32
    %c0_i32_1 = arith.constant 0 : i32
    return %c0_i32, %c0_i32_0 : i32, i32
  }
  func.func @transform_2(%arg0: i32) -> (i32, i32) {
    %c0_i32 = arith.constant 0 : i32
    %c0_i32_0 = arith.constant 0 : i32
    %c0_i32_1 = arith.constant 0 : i32
    return %c0_i32, %c0_i32_0 : i32, i32
  }
  func.func @transform_3(%arg0: i32) -> (i32, i32) {
    %c0_i32 = arith.constant 0 : i32
    %c0_i32_0 = arith.constant 0 : i32
    return %arg0, %c0_i32 : i32, i32
  }
}

</mosaic_0001>

<llo_original>
// kernel: tpu_custom_call.1
$region0: #{tpu_custom_call.1}
  #allocation0 [shape = 'u32[]', space=smem, size = 0x4, offset = 0x4, fixed_abs, tag = 'smem constant byte address 0x4 - core index']
  #allocation1 [shape = 'u32[72,128]{1,0:T(1,128)}', space=vmem, size = 0x9000, scoped, tag = 'internal scratch']
  %s0 = inlined_call_operand.hbm [shape: bf16[16,32], index: 0, kind: input, shape index: {}]
  %s1 = inlined_call_operand.hbm [shape: bf16[32,256], index: 1, kind: input, shape index: {}]
  %s2 = inlined_call_operand.hbm [shape: f32[1,256], index: 2, kind: input, shape index: {}]
  %s3 = inlined_call_operand.hbm [shape: f32[16,256], index: 3, kind: output, shape index: {}]
  %s4 = sld [smem:[#allocation0]]
  $region34: #{tpu_custom_call.1} parent=0
    _
  %s6 = ssub.s32 1, %s4
  %s7 = scalar_select 0, %s6, %s4
  $region1: #{tpu_custom_call.1} parent=0
    #allocation2 [shape = 'u8[4096]{0}', space=vmem, size = 0x1000, scoped, tag = 'input window, operand 0, single buffered']
    #allocation3 [shape = 's32[1]{0}', space=sflag, size = 0x4, scoped, tag = 'scoped memory for tpu_custom_call.1']
    #allocation4 [shape = 's32[1]{0}', space=sflag, size = 0x4, scoped, tag = 'scoped memory for tpu_custom_call.1']
    #allocation5 [shape = 'u8[16384]{0}', space=vmem, size = 0x4000, scoped, tag = 'input window, operand 1, single buffered']
    #allocation6 [shape = 's32[1]{0}', space=sflag, size = 0x4, scoped, tag = 'scoped memory for tpu_custom_call.1']
    #allocation7 [shape = 'u8[1024]{0}', space=vmem, size = 0x400, scoped, tag = 'input window, operand 2, single buffered']
    #allocation8 [shape = 'u8[16384]{0}', space=vmem, size = 0x4000, scoped, tag = 'output window, operand 0, single buffered']
    %8 = vsyncpa [#allocation3], 0
    %9 = vsyncpa [#allocation6], 0
    %10 = vsyncpa [#allocation4], 0
    // Predicated region
    $region2: #{tpu_custom_call.1} parent=1 // pred_check
      _
    $region3: #{tpu_custom_call.1} parent=1 // pred_check_branch
      %12 = sbr.rel (0) target = $region5
    $region4: #{tpu_custom_call.1} parent=1 // pred_region
      %14 = vsyncadd [#allocation3], 0
      %s15 = sshll.u32 %s0, 4
      %s16 = int_to_ptr.hbm [resolvable:$true] %s15
      %s17 = sshll.u32 [#allocation2], 4
      %s18 = int_to_ptr.vmem [resolvable:$true] %s17
      %23 = dma.hbm_to_vmem [thread:$0]  %s16, 128, %s18, [#allocation3], 64, 64, 4
    $region5: #{tpu_custom_call.1} parent=1 // pred_fallthru
      _
    // Predicated region
    $region6: #{tpu_custom_call.1} parent=1 // pred_check
      _
    $region7: #{tpu_custom_call.1} parent=1 // pred_check_branch
      %25 = sbr.rel (0) target = $region9
    $region8: #{tpu_custom_call.1} parent=1 // pred_region
      %27 = vsyncadd [#allocation6], 0
      %s28 = sshll.u32 %s1, 4
      %s29 = int_to_ptr.hbm [resolvable:$true] %s28
      %s30 = sshll.u32 [#allocation5], 4
      %s31 = int_to_ptr.vmem [resolvable:$true] %s30
      %36 = dma.hbm_to_vmem [thread:$0]  %s29, 512, %s31, [#allocation6], 128, 128, 8
    $region9: #{tpu_custom_call.1} parent=1 // pred_fallthru
      _
    // Predicated region
    $region10: #{tpu_custom_call.1} parent=1 // pred_check
      _
    $region11: #{tpu_custom_call.1} parent=1 // pred_check_branch
      %38 = sbr.rel (0) target = $region13
    $region12: #{tpu_custom_call.1} parent=1 // pred_region
      %40 = vsyncadd [#allocation6], 0
      %s42 = sshll.u32 %s2, 4
      %s43 = int_to_ptr.hbm [resolvable:$true] %s42
      %s44 = sshll.u32 [#allocation7], 4
      %s45 = int_to_ptr.vmem [resolvable:$true] %s44
      %47 = dma.hbm_to_vmem [thread:$0]  %s43, 32, %s45, [#allocation6]
    $region13: #{tpu_custom_call.1} parent=1 // pred_fallthru
      _
    // Predicated region
    $region14: #{tpu_custom_call.1} parent=1 // pred_check
      _
    $region15: #{tpu_custom_call.1} parent=1 // pred_check_branch
      %49 = sbr.rel (0) target = $region17
    $region16: #{tpu_custom_call.1} parent=1 // pred_region
      %51 = dma.done [#allocation3], 128
    $region17: #{tpu_custom_call.1} parent=1 // pred_fallthru
      _
    // Predicated region
    $region18: #{tpu_custom_call.1} parent=1 // pred_check
      _
    $region19: #{tpu_custom_call.1} parent=1 // pred_check_branch
      %53 = sbr.rel (0) target = $region21
    $region20: #{tpu_custom_call.1} parent=1 // pred_region
      %55 = dma.done [#allocation6], 512
    $region21: #{tpu_custom_call.1} parent=1 // pred_fallthru
      _
    // Predicated region
    $region22: #{tpu_custom_call.1} parent=1 // pred_check
      _
    $region23: #{tpu_custom_call.1} parent=1 // pred_check_branch
      %57 = sbr.rel (0) target = $region25
    $region24: #{tpu_custom_call.1} parent=1 // pred_region
      %59 = dma.done [#allocation6], 32
    $region25: #{tpu_custom_call.1} parent=1 // pred_fallthru
      _
    %v61 = vld [vmem:[#allocation2] sm:$0xf]
    %v62 = vld [vmem:[#allocation2 + $0x4] sm:$0xf]
    %v63 = vld [vmem:[#allocation5] sm:$0xff]
    %v64 = vld [vmem:[#allocation5 + $0x8] sm:$0xff]
    %v65 = vld [vmem:[#allocation5 + $0x10] sm:$0xff]
    %v66 = vld [vmem:[#allocation5 + $0x18] sm:$0xff]
    %v67 = vld [vmem:[#allocation7] sm:$0x3]
    %v69 = vperm.slane %v67, 0
    %v70 = vperm.slane %v67, 1
    %v75 = vunpack.c.l.b16 %v61
    %v76 = vunpack.c.l.b16 %v62
    %v77 = vpack.c.b16 %v76, %v75
    %v82 = vunpack.c.l.b16 %v63
    %v83 = vunpack.c.h.b16 %v63
    %v84 = vunpack.c.l.b16 %v64
    %v85 = vunpack.c.h.b16 %v64
    %v86 = vunpack.c.l.b16 %v65
    %v87 = vunpack.c.h.b16 %v65
    %v88 = vunpack.c.l.b16 %v66
    %v89 = vunpack.c.h.b16 %v66
    %v90 = vpack.c.b16 %v84, %v82
    %v91 = vpack.c.b16 %v85, %v83
    %v92 = vpack.c.b16 %v88, %v86
    %v93 = vpack.c.b16 %v89, %v87
    %vm98 = vcmask 261120
    %v100 = vsel %vm98, %v77, 0
    %102 = vmatpush.bf16.msra.mxu0 0
    %103 = vmatpush.bf16.msra.mxu0 0
    %104 = vmatpush.bf16.msra.mxu0 0
    %105 = vmatpush.bf16.msra.mxu0 0
    %106 = vmatpush.bf16.msra.mxu0 0
    %107 = vmatpush.bf16.msra.mxu0 0
    %108 = vmatpush.bf16.msra.mxu0 %v92
    %109 = vmatpush.bf16.msra.mxu0 %v90
    %110 = vmatmul.bf16.gmra.mxu0 %v100
    %v111 = vpop.f32.mrf.mxu0
    %v112 = vadd.f32 %v69, %v111
    %v113 = vpop.f32.mrf.mxu0
    %v114 = vadd.f32 %v69, %v113
    %115 = vdwg.mxu0
    %116 = vmatpush.bf16.msra.mxu0 0
    %117 = vmatpush.bf16.msra.mxu0 0
    %118 = vmatpush.bf16.msra.mxu0 0
    %119 = vmatpush.bf16.msra.mxu0 0
    %120 = vmatpush.bf16.msra.mxu0 0
    %121 = vmatpush.bf16.msra.mxu0 0
    %122 = vmatpush.bf16.msra.mxu0 %v93
    %123 = vmatpush.bf16.msra.mxu0 %v91
    %124 = vmatmul.bf16.gmra.mxu0 %v100
    %v125 = vpop.f32.mrf.mxu0
    %v126 = vadd.f32 %v70, %v125
    %v127 = vpop.f32.mrf.mxu0
    %v128 = vadd.f32 %v70, %v127
    %129 = vdwg.mxu0
    %v130 = vmul.f32 %v112, 0.5
    %v131 = vmul.f32 %v126, 0.5
    %v132 = vmul.f32 %v114, 0.5
    %v133 = vmul.f32 %v128, 0.5
    %v134 = vmax.f32 %v130, %v131
    %135 = vmax.xlane.f32.xlu0 %v134
    %v136 = vpop.xlane.xlu0 %135
    %v137 = vmax.f32 %v132, %v133
    %138 = vmax.xlane.f32.xlu0 %v137
    %v139 = vpop.xlane.xlu0 %138
    %v140 = vsub.f32 %v130, %v136
    %v141 = vsub.f32 %v131, %v136
    %v142 = vsub.f32 %v132, %v139
    %v143 = vsub.f32 %v133, %v139
    %v144 = vmul.f32 %v140, 1.442695
    %v145 = vpow.pop %v144
    %v146 = vmul.f32 %v141, 1.442695
    %v147 = vpow.pop %v146
    %v148 = vmul.f32 %v142, 1.442695
    %v149 = vpow.pop %v148
    %v150 = vmul.f32 %v143, 1.442695
    %v151 = vpow.pop %v150
    %v152 = vadd.f32 %v145, %v147
    %153 = vadd.xlane.f32.xlu0 %v152
    %v154 = vpop.xlane.xlu0 %153
    %v155 = vadd.f32 %v149, %v151
    %156 = vadd.xlane.f32.xlu0 %v155
    %v157 = vpop.xlane.xlu0 %156
    %v158 = vlog2.pop %v154
    %v159 = vmul.f32 %v158, 0.6931472
    %v160 = vlog2.pop %v157
    %v161 = vmul.f32 %v160, 0.6931472
    %v162 = vsub.f32 %v140, %v159
    %v163 = vsub.f32 %v141, %v159
    %v164 = vsub.f32 %v142, %v161
    %v165 = vsub.f32 %v143, %v161
    %166 = vst [vmem:[#allocation8] sm:$0xff] %v162
    %167 = vst [vmem:[#allocation8 + $0x8] sm:$0xff] %v163
    %168 = vst [vmem:[#allocation8 + $0x10] sm:$0xff] %v164
    %169 = vst [vmem:[#allocation8 + $0x18] sm:$0xff] %v165
    // Predicated region
    $region26: #{tpu_custom_call.1} parent=1 // pred_check
      _
    $region27: #{tpu_custom_call.1} parent=1 // pred_check_branch
      %171 = sbr.rel (0) target = $region29
    $region28: #{tpu_custom_call.1} parent=1 // pred_region
      %173 = vsyncadd [#allocation4], 0
      %s174 = sshll.u32 [#allocation8], 4
      %s175 = int_to_ptr.vmem [resolvable:$true] %s174
      %s176 = sshll.u32 %s3, 4
      %s177 = int_to_ptr.hbm [resolvable:$true] %s176
      %182 = dma.vmem_to_hbm [thread:$0]  %s175, 512, %s177, [#allocation4], 256, 256, 16
    $region29: #{tpu_custom_call.1} parent=1 // pred_fallthru
      _
    // Predicated region
    $region30: #{tpu_custom_call.1} parent=1 // pred_check
      _
    $region31: #{tpu_custom_call.1} parent=1 // pred_check_branch
      %184 = sbr.rel (0) target = $region33
    $region32: #{tpu_custom_call.1} parent=1 // pred_region
      %186 = dma.done [#allocation4], 512
    $region33: #{tpu_custom_call.1} parent=1 // pred_fallthru
      _
    %187 = vsyncpa [#allocation3], 1
    %188 = vsyncpa [#allocation6], 1
    %189 = vsyncpa [#allocation4], 1

</llo_original>
